<compile_context>
chip_gen: v5e
topology: v5e:2x2
jax: 0.10.0
libtpu: 0.0.40
codegen_flags: <defaults>
</compile_context>

<pallas_src>
import math

import jax
import jax.numpy as jnp
from jax.experimental import pallas as pl
from jax.experimental.pallas import tpu as pltpu

N_QUANT = 5                      # torch.quantile q = [0, .25, .5, .75, 1]
NEW_DIMS = 1 + N_QUANT + 1       # get_stats width factor per hidden unit = 7
C_FEAT = 16                      # 1 err + 4 w-feat + 4 b-feat + 3 ones + 4 pad

_VMEM = pl.BlockSpec(memory_space=pltpu.MemorySpace.VMEM)


# ---------------------------------------------------------------- kernel ----
def _embed_kernel(w_ref, f_ref, o_ref):
    # w_ref: (ROWS, C)  packed [w_err|W_w|W_b|b_err|b_w|b_b|0] rows 0..H-1,
    #                   row H = w_out[:H] @ packed (fused output-Linear row),
    #                   remaining rows zero (sublane padding).
    # f_ref: (C, M)     per-element feature channels, lane-padded to 128k.
    # o_ref: (ROWS, M)  embeddings (rows 0..H-1) + head pre-activation (row H),
    #                   lane-dense unmasked stores.
    o_ref[...] = jnp.dot(w_ref[...], f_ref[...],
                         preferred_element_type=jnp.float32)


# ------------------------------------------------------------ packing utils -
def _pack_params(params, rows_pad):
    h = params["b_err"].shape[0]
    w_main = jnp.concatenate(
        [params["w_err"][:, None],          # channel 0  : error value
         params["w_w"],                     # channels 1-4: weight features
         params["w_b"],                     # channels 5-8: bias features
         params["b_err"][:, None],          # channel 9  : x1 on error cols
         params["b_w"][:, None],            # channel 10 : x1 on weight cols
         params["b_b"][:, None],            # channel 11 : x1 on bias cols
         jnp.zeros((h, C_FEAT - 12), jnp.float32)], axis=1)      # (H, 16)
    # Fused output-Linear row: (w_out[:H] @ W_packed) @ feat == emb @ w_out[:H]
    head_row = jnp.einsum("h,hc->c", params["w_out"][:h], w_main,
                          precision=jax.lax.Precision.HIGHEST)   # (16,)
    w_ext = jnp.zeros((rows_pad, C_FEAT), jnp.float32)
    return w_ext.at[:h].set(w_main).at[h].set(head_row)          # (ROWS, 16)


def _pack_features(errors, wfeat, bfeat, m_pad):
    # Scatter-style build of the (16, M_pad) feature matrix (few HLOs).
    e = errors.reshape(-1)                                        # (me,)
    wstack = jnp.stack([f.reshape(-1) for f in wfeat], axis=0)    # (4, mw)
    bstack = jnp.stack([f.reshape(-1) for f in bfeat], axis=0)    # (4, mb)
    me, mw, mb = e.shape[0], wstack.shape[1], bstack.shape[1]
    feat = jnp.zeros((C_FEAT, m_pad), jnp.float32)
    feat = feat.at[0, :me].set(e)
    feat = feat.at[1:5, me:me + mw].set(wstack)
    feat = feat.at[5:9, me + mw:me + mw + mb].set(bstack)
    feat = feat.at[9, :me].set(1.0)
    feat = feat.at[10, me:me + mw].set(1.0)
    feat = feat.at[11, me + mw:me + mw + mb].set(1.0)
    return feat


def _get_stats_hbn(x):
    # x: (H, B, n) — same stats as torch get_stats on (B, n, H), computed on
    # the kernel's native (H, M) layout so no large transpose is needed.
    mean = jnp.mean(x, axis=-1)                                   # (H, B)
    var = jnp.var(x, axis=-1, ddof=1)                             # (H, B)
    q = jnp.quantile(x, jnp.array([0.0, 0.25, 0.5, 0.75, 1.0]), axis=-1)  # (5,H,B)
    q = jnp.transpose(q, (2, 1, 0)).reshape(x.shape[1], -1)       # (B, 5H) h-major
    return jnp.concatenate([mean.T, q, var.T], axis=1)            # (B, 7H)


# ---------------------------------------------------------------- forward ---
def dkl_guesser_forward(params, errors, before_w_mu, before_w_sigma,
                        before_b_mu, before_b_sigma, after_w_mu, after_w_sigma,
                        after_b_mu, after_b_sigma):
    b, d1, d2, _ = errors.shape
    h = params["b_err"].shape[0]
    nw, nb = before_w_mu.shape[1], before_b_mu.shape[1]
    s = d1 * d2
    me, mw, mb = b * s, b * nw, b * nb
    m = me + mw + mb
    m_pad = max(128, ((m + 127) // 128) * 128)      # lane-dense (multiple of 128)
    rows_pad = ((h + 1 + 7) // 8) * 8               # sublane-dense (multiple of 8)

    hi = jax.lax.Precision.HIGHEST
    w_out, b_out = params["w_out"], params["b_out"]

    wfeat = (before_w_mu, after_w_mu - before_w_mu,
             before_w_sigma, after_w_sigma - before_w_sigma)
    bfeat = (before_b_mu, after_b_mu - before_b_mu,
             before_b_sigma, after_b_sigma - before_b_sigma)

    w_ext = _pack_params(params, rows_pad)              # (ROWS, 16)
    feat = _pack_features(errors, wfeat, bfeat, m_pad)  # (16, M_pad)

    # --- single kernel: 3 embedding Linears + fused output-Linear row -------
    emb = pl.pallas_call(
        _embed_kernel,
        out_shape=jax.ShapeDtypeStruct((rows_pad, m_pad), jnp.float32),
        in_specs=[_VMEM, _VMEM],
        out_specs=_VMEM,
        cost_estimate=pl.CostEstimate(
            flops=2 * rows_pad * C_FEAT * m_pad, transcendentals=0,
            bytes_accessed=4 * (rows_pad * C_FEAT + C_FEAT * m_pad
                                + rows_pad * m_pad)),
    )(w_ext, feat)                                      # (ROWS, M_pad)

    # --- stats on the kernel's native (H, M) layout --------------------------
    stats = jnp.concatenate(
        [_get_stats_hbn(emb[:h, :me].reshape(h, b, s)),
         _get_stats_hbn(emb[:h, me:me + mw].reshape(h, b, nw)),
         _get_stats_hbn(emb[:h, me + mw:m].reshape(h, b, nb))], axis=-1)  # (B,21H)

    # Tiled-stats part of the output Linear collapses to one scalar per row.
    stats_scalar = (jnp.einsum("bk,k->b", stats, w_out[h:], precision=hi)
                    + b_out)                                               # (B,)

    # Per-element pre-activation came out of the kernel as row H.
    z = emb[h, :me].reshape(b, s) + stats_scalar[:, None]                  # (B, S)
    return jax.nn.softplus(z).reshape(b, d1, d2, 1)


# ------------------------------------------------------------- reference ----
def _get_stats_ref(x):
    if x.ndim == 4:
        x = x.reshape(x.shape[0], x.shape[1] * x.shape[2], x.shape[3])
    mean = jnp.mean(x, axis=1)
    q = jnp.quantile(x, jnp.array([0.0, 0.25, 0.5, 0.75, 1.0]), axis=1)  # (5,B,H)
    q = jnp.transpose(q, (1, 2, 0)).reshape(x.shape[0], -1)              # (B,5H)
    var = jnp.var(x, axis=1, ddof=1)
    return jnp.concatenate([mean, q, var], axis=1)                       # (B,7H)


def dkl_guesser_ref(params, errors, bwm, bws, bbm, bbs, awm, aws, abm, abs_):
    hi = jax.lax.Precision.HIGHEST
    e = errors * params["w_err"] + params["b_err"]                # Linear(1,H)
    wfeat = jnp.stack([bwm, awm - bwm, bws, aws - bws], axis=-1)  # (B,Nw,4)
    w_emb = (jnp.einsum("bnk,hk->bnh", wfeat, params["w_w"], precision=hi)
             + params["b_w"])
    bfeat = jnp.stack([bbm, abm - bbm, bbs, abs_ - bbs], axis=-1)
    b_emb = (jnp.einsum("bnk,hk->bnh", bfeat, params["w_b"], precision=hi)
             + params["b_b"])
    stats = jnp.concatenate(
        [_get_stats_ref(e), _get_stats_ref(w_emb), _get_stats_ref(b_emb)], axis=-1)
    stats = jnp.tile(stats[:, None, None, :], (1, e.shape[1], e.shape[2], 1))
    together = jnp.concatenate([e, stats], axis=-1)
    z = (jnp.einsum("bijk,k->bij", together, params["w_out"], precision=hi)
         + params["b_out"])
    return jax.nn.softplus(z)[..., None]


def init_dkl_params(key, hidden):
    ks = jax.random.split(key, 8)

    def u(k, shape, fan_in):
        bound = 1.0 / math.sqrt(fan_in)
        return jax.random.uniform(k, shape, jnp.float32, -bound, bound)

    out_in = (3 * NEW_DIMS + 1) * hidden          # 22 * dkl_hidden, as in torch
    return {
        "w_err": u(ks[0], (hidden,), 1), "b_err": u(ks[1], (hidden,), 1),
        "w_w": u(ks[2], (hidden, 4), 4), "b_w": u(ks[3], (hidden,), 4),
        "w_b": u(ks[4], (hidden, 4), 4), "b_b": u(ks[5], (hidden,), 4),
        "w_out": u(ks[6], (out_in,), out_in), "b_out": u(ks[7], (), out_in),
    }


if __name__ == "__main__":
    B, D1, D2 = 2, 8, 8        # errors grid
    NW, NB = 16, 8             # flattened weight / bias element counts
    HIDDEN = 32                # args.dkl_hidden

    key = jax.random.PRNGKey(0)
    kp, *kd = jax.random.split(key, 11)
    params = init_dkl_params(kp, HIDDEN)

    errors = jax.random.normal(kd[0], (B, D1, D2, 1), jnp.float32)
    bwm = jax.random.normal(kd[1], (B, NW), jnp.float32)
    bws = jax.nn.softplus(jax.random.normal(kd[2], (B, NW), jnp.float32))
    awm = jax.random.normal(kd[3], (B, NW), jnp.float32)
    aws = jax.nn.softplus(jax.random.normal(kd[4], (B, NW), jnp.float32))
    bbm = jax.random.normal(kd[5], (B, NB), jnp.float32)
    bbs = jax.nn.softplus(jax.random.normal(kd[6], (B, NB), jnp.float32))
    abm = jax.random.normal(kd[7], (B, NB), jnp.float32)
    abs_ = jax.nn.softplus(jax.random.normal(kd[8], (B, NB), jnp.float32))

    fwd = jax.jit(dkl_guesser_forward)
    out = jax.block_until_ready(
        fwd(params, errors, bwm, bws, bbm, bbs, awm, aws, abm, abs_))

    ref = dkl_guesser_ref(params, errors, bwm, bws, bbm, bbs, awm, aws, abm, abs_)
    assert out.shape == (B, D1, D2, 1)
    assert bool(jnp.all(out > 0.0))                       # softplus is positive
    assert bool(jnp.allclose(out, ref, atol=1e-4, rtol=1e-4)), \
        float(jnp.max(jnp.abs(out - ref)))

    print("KERNEL_OK")
</pallas_src>

<mosaic_0001>
module attributes {stable_mosaic.version = 11 : i64} {
  func.func @_embed_kernel(%arg0: memref<40x16xf32, #tpu.memory_space<vmem>>, %arg1: memref<16x256xf32, #tpu.memory_space<vmem>>, %arg2: memref<40x256xf32, #tpu.memory_space<vmem>>) attributes {dimension_semantics = [], scalar_prefetch = 0 : i64, scratch_operands = 0 : i64, tpu.core_type = #tpu.core_type<tc>} {
    %c0 = arith.constant 0 : index
    %c0_0 = arith.constant 0 : index
    %0 = vector.load %arg0[%c0, %c0_0] : memref<40x16xf32, #tpu.memory_space<vmem>>, vector<40x16xf32>
    %c0_1 = arith.constant 0 : index
    %c0_2 = arith.constant 0 : index
    %1 = vector.load %arg1[%c0_1, %c0_2] : memref<16x256xf32, #tpu.memory_space<vmem>>, vector<16x256xf32>
    %cst = arith.constant dense<0.000000e+00> : vector<40x256xf32>
    %2 = tpu.matmul %0, %1, %cst {dimension_numbers = #tpu.dot_dimension_numbers<[1], [0], [0], [1], [0, 0, 1, 1], [], []>} : vector<40x16xf32>, vector<16x256xf32>, vector<40x256xf32> -> vector<40x256xf32>
    %c0_3 = arith.constant 0 : index
    %c0_4 = arith.constant 0 : index
    %3 = vector.load %arg2[%c0_3, %c0_4] : memref<40x256xf32, #tpu.memory_space<vmem>>, vector<40x256xf32>
    tpu.vector_store %arg2[%c0_3, %c0_4], %2 {strides = array<i32>} : memref<40x256xf32, #tpu.memory_space<vmem>>, vector<40x256xf32>,
    return
  }
}

</mosaic_0001>

<llo_original>
// kernel: sub.46
$region0: #{sub.46}
  #allocation0 [shape = 's32[1]{0}', space=sflag, size = 0x4, scoped, tag = 'scoped memory for sub.46']
  %s0 = inlined_call_operand.vmem [shape: f32[2,16], index: 0, kind: input, shape index: {}]
  %s1 = inlined_call_operand.vmem [shape: f32[2,16], index: 1, kind: input, shape index: {}]
  %s2 = inlined_call_operand.vmem [shape: f32[2,16], index: 2, kind: output, shape index: {}]
  %v3 = vld [vmem:[%s0] sm:$0x3]
  %v4 = vld [vmem:[%s1] sm:$0x3]
  %5 = xla_tuple %v3, %v4
  %6 = xla_tuple %5
  %v7 = vsub.f32 %v3, %v4
  %8 = xla_tuple %v7
  %9 = vst [vmem:[%s2] sm:$0x3] %v7

// kernel: sub.48
$region0: #{sub.48}
  #allocation0 [shape = 's32[1]{0}', space=sflag, size = 0x4, scoped, tag = 'scoped memory for sub.48']
  %s0 = inlined_call_operand.vmem [shape: f32[2,8], index: 0, kind: input, shape index: {}]
  %s1 = inlined_call_operand.vmem [shape: f32[2,8], index: 1, kind: input, shape index: {}]
  %s2 = inlined_call_operand.vmem [shape: f32[2,8], index: 2, kind: output, shape index: {}]
  %v3 = vld [vmem:[%s0] sm:$0x3]
  %v4 = vld [vmem:[%s1] sm:$0x3]
  %5 = xla_tuple %v3, %v4
  %6 = xla_tuple %5
  %v7 = vsub.f32 %v3, %v4
  %8 = xla_tuple %v7
  %9 = vst [vmem:[%s2] sm:$0x3] %v7

// kernel: dkl_guesser_forward.1
$region0: #{dkl_guesser_forward.1}
  #allocation0 [shape = 'u32[]', space=smem, size = 0x4, offset = 0x4, fixed_abs, tag = 'smem constant byte address 0x4 - core index']
  #allocation1 [shape = 'u32[72,128]{1,0:T(1,128)}', space=vmem, size = 0x9000, scoped, tag = 'internal scratch']
  %s0 = inlined_call_operand.vmem [shape: f32[40,16], index: 0, kind: input, shape index: {}]
  %s1 = inlined_call_operand.vmem [shape: f32[16,256], index: 1, kind: input, shape index: {}]
  %s2 = inlined_call_operand.vmem [shape: f32[40,256], index: 2, kind: output, shape index: {}]
  %s3 = sld [smem:[#allocation0]]
  $region18: #{dkl_guesser_forward.1} parent=0
    _
  %s5 = ssub.s32 1, %s3
  %s6 = scalar_select 0, %s5, %s3
  // Predicated region
  $region2: #{dkl_guesser_forward.1} parent=0 // pred_check
    _
  $region3: #{dkl_guesser_forward.1} parent=0 // pred_check_branch
    %8 = sbr.rel (0) target = $region5
  $region4: #{dkl_guesser_forward.1} parent=0 // pred_region
    _
  $region5: #{dkl_guesser_forward.1} parent=0 // pred_fallthru
    _
  // Predicated region
  $region6: #{dkl_guesser_forward.1} parent=0 // pred_check
    _
  $region7: #{dkl_guesser_forward.1} parent=0 // pred_check_branch
    %10 = sbr.rel (0) target = $region9
  $region8: #{dkl_guesser_forward.1} parent=0 // pred_region
    _
  $region9: #{dkl_guesser_forward.1} parent=0 // pred_fallthru
    _
  %v11 = vld [vmem:[%s0] sm:$0xff]
  %v12 = vld [vmem:[%s0 + $0x8] sm:$0xff]
  %v13 = vld [vmem:[%s0 + $0x10] sm:$0xff]
  %v14 = vld [vmem:[%s0 + $0x18] sm:$0xff]
  %v15 = vld [vmem:[%s0 + $0x20] sm:$0xff]
  %v16 = vld [vmem:[%s1] sm:$0xff]
  %v17 = vld [vmem:[%s1 + $0x8] sm:$0xff]
  %v18 = vld [vmem:[%s1 + $0x10] sm:$0xff]
  %v19 = vld [vmem:[%s1 + $0x18] sm:$0xff]
  %vm20 = vcmask 130048
  %v22 = vsel %vm20, %v11, 0
  %v25 = vsel %vm20, %v12, 0
  %v28 = vsel %vm20, %v13, 0
  %v31 = vsel %vm20, %v14, 0
  %v34 = vsel %vm20, %v15, 0
  %36 = vmatpush.msra.mxu0 0.0
  %37 = vmatpush.msra.mxu0 0.0
  %38 = vmatpush.msra.mxu0 0.0
  %39 = vmatpush.msra.mxu0 0.0
  %40 = vmatpush.msra.mxu0 0.0
  %41 = vmatpush.msra.mxu0 0.0
  %42 = vmatpush.msra.mxu0 0.0
  %43 = vmatpush.msra.mxu0 0.0
  %44 = vmatpush.msra.mxu0 0.0
  %45 = vmatpush.msra.mxu0 0.0
  %46 = vmatpush.msra.mxu0 0.0
  %47 = vmatpush.msra.mxu0 0.0
  %48 = vmatpush.msra.mxu0 0.0
  %49 = vmatpush.msra.mxu0 0.0
  %50 = vmatpush.msra.mxu0 %v18
  %51 = vmatpush.msra.mxu0 %v16
  %52 = vmatmul.f32.gmra.mxu0 %v22
  %v53 = vpop.f32.mrf.mxu0
  %v54 = vadd.f32 0.0, %v53
  %55 = vmatmul.f32.gmra.mxu0 %v25
  %v56 = vpop.f32.mrf.mxu0
  %v57 = vadd.f32 0.0, %v56
  %58 = vmatmul.f32.gmra.mxu0 %v28
  %v59 = vpop.f32.mrf.mxu0
  %v60 = vadd.f32 0.0, %v59
  %61 = vmatmul.f32.gmra.mxu0 %v31
  %v62 = vpop.f32.mrf.mxu0
  %v63 = vadd.f32 0.0, %v62
  %64 = vmatmul.f32.gmra.mxu0 %v34
  %v65 = vpop.f32.mrf.mxu0
  %v66 = vadd.f32 0.0, %v65
  %67 = vdwg.mxu0
  %68 = vmatpush.msra.mxu0 0.0
  %69 = vmatpush.msra.mxu0 0.0
  %70 = vmatpush.msra.mxu0 0.0
  %71 = vmatpush.msra.mxu0 0.0
  %72 = vmatpush.msra.mxu0 0.0
  %73 = vmatpush.msra.mxu0 0.0
  %74 = vmatpush.msra.mxu0 0.0
  %75 = vmatpush.msra.mxu0 0.0
  %76 = vmatpush.msra.mxu0 0.0
  %77 = vmatpush.msra.mxu0 0.0
  %78 = vmatpush.msra.mxu0 0.0
  %79 = vmatpush.msra.mxu0 0.0
  %80 = vmatpush.msra.mxu0 0.0
  %81 = vmatpush.msra.mxu0 0.0
  %82 = vmatpush.msra.mxu0 %v19
  %83 = vmatpush.msra.mxu0 %v17
  %84 = vmatmul.f32.gmra.mxu0 %v22
  %v85 = vpop.f32.mrf.mxu0
  %v86 = vadd.f32 0.0, %v85
  %87 = vmatmul.f32.gmra.mxu0 %v25
  %v88 = vpop.f32.mrf.mxu0
  %v89 = vadd.f32 0.0, %v88
  %90 = vmatmul.f32.gmra.mxu0 %v28
  %v91 = vpop.f32.mrf.mxu0
  %v92 = vadd.f32 0.0, %v91
  %93 = vmatmul.f32.gmra.mxu0 %v31
  %v94 = vpop.f32.mrf.mxu0
  %v95 = vadd.f32 0.0, %v94
  %96 = vmatmul.f32.gmra.mxu0 %v34
  %v97 = vpop.f32.mrf.mxu0
  %v98 = vadd.f32 0.0, %v97
  %99 = vdwg.mxu0
  %100 = vst [vmem:[%s2] sm:$0xff] %v54
  %101 = vst [vmem:[%s2 + $0x8] sm:$0xff] %v86
  %102 = vst [vmem:[%s2 + $0x10] sm:$0xff] %v57
  %103 = vst [vmem:[%s2 + $0x18] sm:$0xff] %v89
  %104 = vst [vmem:[%s2 + $0x20] sm:$0xff] %v60
  %105 = vst [vmem:[%s2 + $0x28] sm:$0xff] %v92
  %106 = vst [vmem:[%s2 + $0x30] sm:$0xff] %v63
  %107 = vst [vmem:[%s2 + $0x38] sm:$0xff] %v95
  %108 = vst [vmem:[%s2 + $0x40] sm:$0xff] %v66
  %109 = vst [vmem:[%s2 + $0x48] sm:$0xff] %v98
  // Predicated region
  $region10: #{dkl_guesser_forward.1} parent=0 // pred_check
    _
  $region11: #{dkl_guesser_forward.1} parent=0 // pred_check_branch
    %111 = sbr.rel (0) target = $region13
  $region12: #{dkl_guesser_forward.1} parent=0 // pred_region
    _
  $region13: #{dkl_guesser_forward.1} parent=0 // pred_fallthru
    _
  // Predicated region
  $region14: #{dkl_guesser_forward.1} parent=0 // pred_check
    _
  $region15: #{dkl_guesser_forward.1} parent=0 // pred_check_branch
    %113 = sbr.rel (0) target = $region17
  $region16: #{dkl_guesser_forward.1} parent=0 // pred_region
    _
  $region17: #{dkl_guesser_forward.1} parent=0 // pred_fallthru
    _

</llo_original>
